<compile_context>
chip_gen: v5e
topology: v5e:2x2
jax: 0.10.0
libtpu: 0.0.40
codegen_flags: <defaults>
</compile_context>

<pallas_src>
import functools
import math

import jax
import jax.numpy as jnp
from jax.experimental import pallas as pl
from jax.experimental.pallas import tpu as pltpu


# --------------------------------------------------------------------------
# helpers
# --------------------------------------------------------------------------
def _round_up(x: int, m: int) -> int:
    return ((x + m - 1) // m) * m


def _pick_tm(batch: int):
    """Pick tm (multiple of 16 for bf16 sublanes) minimising padded-row waste."""
    base = _round_up(batch, 16)
    tol = max(8, base // 8)               # allow ~12.5% extra padded rows
    for tm in (256, 128, 64, 32, 16):
        m_pad = _round_up(batch, tm)
        if m_pad - base <= tol:
            return tm, m_pad
    return 16, base


def _pick_tn(h_pad: int, m_blocks: int) -> int:
    for tn in (512, 256, 128):
        if h_pad % tn != 0:
            continue
        # v7x has 2 TensorCores: if the M grid collapsed to one block, make
        # sure the "parallel" N axis still exposes at least two blocks.
        if m_blocks == 1 and tn > 128 and h_pad // tn < 2:
            continue
        return tn
    return h_pad


def _pick_tk(kv_pad: int, kt_pad: int) -> int:
    g = math.gcd(kv_pad, kt_pad)          # both are multiples of 128
    for tk in (1024, 512, 256, 128):
        if g % tk == 0:
            return tk
    return 128


# --------------------------------------------------------------------------
# kernels
# --------------------------------------------------------------------------
def _fused_projector_kernel(xv_ref, wv_ref, bv_ref,
                            xt_ref, wt_ref, bt_ref,
                            ov_ref, ot_ref,
                            *, kv_blocks, kt_blocks, k_steps):
    k = pl.program_id(2)

    @pl.when(k == 0)
    def _init():
        # Seed the K-resident f32 output tiles with the broadcast bias row.
        ov_ref[...] = jnp.broadcast_to(bv_ref[...], ov_ref.shape)
        ot_ref[...] = jnp.broadcast_to(bt_ref[...], ot_ref.shape)

    def _vision():
        ov_ref[...] += jnp.dot(xv_ref[...].astype(jnp.bfloat16), wv_ref[...],
                               preferred_element_type=jnp.float32)

    def _text():
        ot_ref[...] += jnp.dot(xt_ref[...].astype(jnp.bfloat16), wt_ref[...],
                               preferred_element_type=jnp.float32)

    # Per-branch K guard: only the branch whose (static) block count spans the
    # full K grid runs unconditionally; the shorter one is skipped past its
    # valid range (its index_maps are clamped, so no extra DMA happens either).
    if kv_blocks == k_steps:
        _vision()
    else:
        pl.when(k < kv_blocks)(_vision)

    if kt_blocks == k_steps:
        _text()
    else:
        pl.when(k < kt_blocks)(_text)


def _small_projector_kernel(xv_ref, wv_ref, bv_ref,
                            xt_ref, wt_ref, bt_ref,
                            ov_ref, ot_ref):
    # Single-block fast path: whole arrays live in VMEM, bf16 cast in-kernel.
    ov_ref[...] = jnp.dot(xv_ref[...].astype(jnp.bfloat16), wv_ref[...],
                          preferred_element_type=jnp.float32) + bv_ref[...]
    ot_ref[...] = jnp.dot(xt_ref[...].astype(jnp.bfloat16), wt_ref[...],
                          preferred_element_type=jnp.float32) + bt_ref[...]


# --------------------------------------------------------------------------
# forward wrapper
# --------------------------------------------------------------------------
_VMEM_LIMIT = 48 * 1024 * 1024       # <= v7x's 64 MiB physical; fine on v5e/v6e
_FAST_PATH_BYTES = 4 * 1024 * 1024   # footprint cap for the single-block path


@functools.partial(jax.jit, static_argnames=("hidden_size",))
def _projector_forward(xv, xt, wv_p, bv_p, wt_p, bt_p, *, hidden_size):
    batch, kv = xv.shape
    _, kt = xt.shape
    kv_pad, h_pad = wv_p.shape
    kt_pad, _ = wt_p.shape
    in_dtype = xv.dtype

    aligned = (kv == kv_pad) and (kt == kt_pad)
    footprint = (batch * (kv + kt) * xv.dtype.itemsize
                 + (kv_pad + kt_pad) * h_pad * 2        # bf16 weights
                 + 2 * batch * h_pad * 4                # f32 outputs
                 + 2 * h_pad * 4)                       # biases

    if aligned and footprint <= _FAST_PATH_BYTES:
        # ---- single-block fast path: no grid, no wrapper pad/cast ----
        ov_p, ot_p = pl.pallas_call(
            _small_projector_kernel,
            out_shape=(jax.ShapeDtypeStruct((batch, h_pad), jnp.float32),
                       jax.ShapeDtypeStruct((batch, h_pad), jnp.float32)),
            compiler_params=pltpu.CompilerParams(
                vmem_limit_bytes=_VMEM_LIMIT),
        )(xv, wv_p, bv_p, xt, wt_p, bt_p)
    else:
        # ---- tiled (M, N, K) path ----
        tm, m_pad = _pick_tm(batch)
        m_blocks = m_pad // tm
        tn = _pick_tn(h_pad, m_blocks)
        tk = _pick_tk(kv_pad, kt_pad)
        kv_blocks = kv_pad // tk
        kt_blocks = kt_pad // tk
        k_steps = max(kv_blocks, kt_blocks)
        grid = (m_blocks, h_pad // tn, k_steps)

        def prep_x(x, k_target):
            b, kdim = x.shape
            if b == m_pad and kdim == k_target:
                return x                      # raw f32; cast inside the kernel
            pad = jnp.pad(x, ((0, m_pad - b), (0, k_target - kdim)))
            return pad.astype(jnp.bfloat16)   # pad once -> also cast once

        xv_p = prep_x(xv, kv_pad)
        xt_p = prep_x(xt, kt_pad)

        def x_map(blocks):
            if blocks == k_steps:
                return lambda i, j, k: (i, k)
            last = blocks - 1                 # clamp: no DMA past valid range
            return lambda i, j, k: (i, jnp.minimum(k, last))

        def w_map(blocks):
            if blocks == k_steps:
                return lambda i, j, k: (k, j)
            last = blocks - 1
            return lambda i, j, k: (jnp.minimum(k, last), j)

        b_spec = pl.BlockSpec((1, tn), lambda i, j, k: (0, j))
        o_spec = pl.BlockSpec((tm, tn), lambda i, j, k: (i, j))

        cost = pl.CostEstimate(
            flops=2 * m_pad * h_pad * (kv_pad + kt_pad),
            transcendentals=0,
            bytes_accessed=(m_pad * kv_pad * xv_p.dtype.itemsize
                            + m_pad * kt_pad * xt_p.dtype.itemsize
                            + (kv_pad + kt_pad) * h_pad * 2
                            + 2 * m_pad * h_pad * 4),
        )

        kernel = functools.partial(_fused_projector_kernel,
                                   kv_blocks=kv_blocks,
                                   kt_blocks=kt_blocks,
                                   k_steps=k_steps)

        ov_p, ot_p = pl.pallas_call(
            kernel,
            out_shape=(jax.ShapeDtypeStruct((m_pad, h_pad), jnp.float32),
                       jax.ShapeDtypeStruct((m_pad, h_pad), jnp.float32)),
            grid_spec=pltpu.PrefetchScalarGridSpec(
                num_scalar_prefetch=0,
                grid=grid,
                in_specs=[pl.BlockSpec((tm, tk), x_map(kv_blocks)),
                          pl.BlockSpec((tk, tn), w_map(kv_blocks)),
                          b_spec,
                          pl.BlockSpec((tm, tk), x_map(kt_blocks)),
                          pl.BlockSpec((tk, tn), w_map(kt_blocks)),
                          b_spec],
                out_specs=[o_spec, o_spec],
            ),
            compiler_params=pltpu.CompilerParams(
                dimension_semantics=("parallel", "parallel", "arbitrary"),
                vmem_limit_bytes=_VMEM_LIMIT,
            ),
            cost_estimate=cost,
        )(xv_p, wv_p, bv_p, xt_p, wt_p, bt_p)
        ov_p = ov_p[:batch]
        ot_p = ot_p[:batch]

    ov = ov_p[:, :hidden_size]
    ot = ot_p[:, :hidden_size]
    if in_dtype != jnp.float32:
        ov = ov.astype(in_dtype)
        ot = ot.astype(in_dtype)
    return ov, ot


# --------------------------------------------------------------------------
# module
# --------------------------------------------------------------------------
class Projector:
    """JAX/Pallas port of the PyTorch Projector module (two fused Linears)."""

    def __init__(self, vision_size, text_size, hidden_size, key):
        kv_w, kv_b, kt_w, kt_b = jax.random.split(key, 4)
        # nn.Linear-style init: uniform(-1/sqrt(in), 1/sqrt(in)).
        bound_v = 1.0 / (vision_size ** 0.5)
        bound_t = 1.0 / (text_size ** 0.5)
        vision_w = jax.random.uniform(kv_w, (hidden_size, vision_size),
                                      jnp.float32, -bound_v, bound_v)
        vision_b = jax.random.uniform(kv_b, (hidden_size,),
                                      jnp.float32, -bound_v, bound_v)
        text_w = jax.random.uniform(kt_w, (hidden_size, text_size),
                                    jnp.float32, -bound_t, bound_t)
        text_b = jax.random.uniform(kt_b, (hidden_size,),
                                    jnp.float32, -bound_t, bound_t)

        self.hidden_size = hidden_size
        # Plain f32 copies kept for the pure-JAX reference check.
        self.vision_w_t = vision_w.T
        self.vision_b = vision_b
        self.text_w_t = text_w.T
        self.text_b = text_b

        # One-time kernel layout prep: transpose + zero-pad to lane-aligned
        # (K_pad, H_pad) and PRE-CAST to bf16 (no per-call convert); biases
        # stay f32 as a (1, H_pad) row.
        h_pad = _round_up(hidden_size, 128)

        def pad_w(w_t):
            kdim, h = w_t.shape
            k_pad = _round_up(kdim, 128)
            return jnp.pad(w_t, ((0, k_pad - kdim),
                                 (0, h_pad - h))).astype(jnp.bfloat16)

        def pad_b(b):
            return jnp.pad(b, (0, h_pad - b.shape[0])).reshape(1, h_pad)

        self._vision_w_p = pad_w(self.vision_w_t)
        self._vision_b_p = pad_b(vision_b)
        self._text_w_p = pad_w(self.text_w_t)
        self._text_b_p = pad_b(text_b)

    def __call__(self, vision_features, text_features):
        return _projector_forward(
            vision_features, text_features,
            self._vision_w_p, self._vision_b_p,
            self._text_w_p, self._text_b_p,
            hidden_size=self.hidden_size)


# --------------------------------------------------------------------------
# demo / self-check
# --------------------------------------------------------------------------
if __name__ == "__main__":
    root = jax.random.PRNGKey(0)

    def run_and_check(proj, vfeat, tfeat):
        v_out, t_out = proj(vfeat, tfeat)
        jax.block_until_ready((v_out, t_out))
        v_ref = vfeat @ proj.vision_w_t + proj.vision_b
        t_ref = tfeat @ proj.text_w_t + proj.text_b
        assert v_out.shape == v_ref.shape
        assert t_out.shape == t_ref.shape
        # bf16 MXU operands vs f32 reference -> loose tolerance.
        assert jnp.allclose(v_out, v_ref, atol=2e-2, rtol=2e-2)
        assert jnp.allclose(t_out, t_ref, atol=2e-2, rtol=2e-2)

    # Config 1: small, lane-aligned -> single-block fast path.
    k_p1, k_v1, k_t1, root = jax.random.split(root, 4)
    proj1 = Projector(vision_size=256, text_size=128, hidden_size=256, key=k_p1)
    run_and_check(proj1,
                  jax.random.normal(k_v1, (16, 256), jnp.float32),
                  jax.random.normal(k_t1, (16, 128), jnp.float32))

    # Config 2: unaligned + asymmetric in-sizes -> tiled path exercising the
    # per-branch K guard and clamped index maps.
    k_p2, k_v2, k_t2, root = jax.random.split(root, 4)
    proj2 = Projector(vision_size=300, text_size=130, hidden_size=160, key=k_p2)
    run_and_check(proj2,
                  jax.random.normal(k_v2, (10, 300), jnp.float32),
                  jax.random.normal(k_t2, (10, 130), jnp.float32))

    print("KERNEL_OK")
</pallas_src>

<mosaic_0001>
module attributes {stable_mosaic.version = 11 : i64} {
  func.func @_small_projector_kernel(%arg0: memref<16x256xf32, #tpu.memory_space<vmem>>, %arg1: memref<256x256xbf16, #tpu.memory_space<vmem>>, %arg2: memref<1x256xf32, #tpu.memory_space<vmem>>, %arg3: memref<16x128xf32, #tpu.memory_space<vmem>>, %arg4: memref<128x256xbf16, #tpu.memory_space<vmem>>, %arg5: memref<1x256xf32, #tpu.memory_space<vmem>>, %arg6: memref<16x256xf32, #tpu.memory_space<vmem>>, %arg7: memref<16x256xf32, #tpu.memory_space<vmem>>) attributes {dimension_semantics = [], scalar_prefetch = 0 : i64, scratch_operands = 0 : i64, tpu.core_type = #tpu.core_type<tc>} {
    %c0 = arith.constant 0 : index
    %c0_0 = arith.constant 0 : index
    %0 = vector.load %arg0[%c0, %c0_0] : memref<16x256xf32, #tpu.memory_space<vmem>>, vector<16x256xf32>
    %1 = arith.truncf %0 : vector<16x256xf32> to vector<16x256xbf16>
    %c0_1 = arith.constant 0 : index
    %c0_2 = arith.constant 0 : index
    %2 = vector.load %arg1[%c0_1, %c0_2] : memref<256x256xbf16, #tpu.memory_space<vmem>>, vector<256x256xbf16>
    %cst = arith.constant dense<0.000000e+00> : vector<16x256xf32>
    %3 = tpu.matmul %1, %2, %cst {dimension_numbers = #tpu.dot_dimension_numbers<[1], [0], [0], [1], [0, 0, 1, 1], [], []>} : vector<16x256xbf16>, vector<256x256xbf16>, vector<16x256xf32> -> vector<16x256xf32>
    %c0_3 = arith.constant 0 : index
    %c0_4 = arith.constant 0 : index
    %4 = vector.load %arg2[%c0_3, %c0_4] : memref<1x256xf32, #tpu.memory_space<vmem>>, vector<1x256xf32>
    %5 = vector.broadcast %4 : vector<1x256xf32> to vector<16x256xf32>
    %6 = arith.addf %3, %5 : vector<16x256xf32>
    %c0_5 = arith.constant 0 : index
    %c0_6 = arith.constant 0 : index
    %7 = vector.load %arg6[%c0_5, %c0_6] : memref<16x256xf32, #tpu.memory_space<vmem>>, vector<16x256xf32>
    tpu.vector_store %arg6[%c0_5, %c0_6], %6 {strides = array<i32>} : memref<16x256xf32, #tpu.memory_space<vmem>>, vector<16x256xf32>,
    %c0_7 = arith.constant 0 : index
    %c0_8 = arith.constant 0 : index
    %8 = vector.load %arg3[%c0_7, %c0_8] : memref<16x128xf32, #tpu.memory_space<vmem>>, vector<16x128xf32>
    %9 = arith.truncf %8 : vector<16x128xf32> to vector<16x128xbf16>
    %c0_9 = arith.constant 0 : index
    %c0_10 = arith.constant 0 : index
    %10 = vector.load %arg4[%c0_9, %c0_10] : memref<128x256xbf16, #tpu.memory_space<vmem>>, vector<128x256xbf16>
    %cst_11 = arith.constant dense<0.000000e+00> : vector<16x256xf32>
    %11 = tpu.matmul %9, %10, %cst_11 {dimension_numbers = #tpu.dot_dimension_numbers<[1], [0], [0], [1], [0, 0, 1, 1], [], []>} : vector<16x128xbf16>, vector<128x256xbf16>, vector<16x256xf32> -> vector<16x256xf32>
    %c0_12 = arith.constant 0 : index
    %c0_13 = arith.constant 0 : index
    %12 = vector.load %arg5[%c0_12, %c0_13] : memref<1x256xf32, #tpu.memory_space<vmem>>, vector<1x256xf32>
    %13 = vector.broadcast %12 : vector<1x256xf32> to vector<16x256xf32>
    %14 = arith.addf %11, %13 : vector<16x256xf32>
    %c0_14 = arith.constant 0 : index
    %c0_15 = arith.constant 0 : index
    %15 = vector.load %arg7[%c0_14, %c0_15] : memref<16x256xf32, #tpu.memory_space<vmem>>, vector<16x256xf32>
    tpu.vector_store %arg7[%c0_14, %c0_15], %14 {strides = array<i32>} : memref<16x256xf32, #tpu.memory_space<vmem>>, vector<16x256xf32>,
    return
  }
}

</mosaic_0001>

<llo_original>
// kernel: _projector_forward.1
$region0: #{_projector_forward.1}
  #allocation0 [shape = 'u32[]', space=smem, size = 0x4, offset = 0x4, fixed_abs, tag = 'smem constant byte address 0x4 - core index']
  #allocation1 [shape = 'u32[72,128]{1,0:T(1,128)}', space=vmem, size = 0x9000, scoped, tag = 'internal scratch']
  %s0 = inlined_call_operand.hbm [shape: f32[16,256], index: 0, kind: input, shape index: {}]
  %s1 = inlined_call_operand.hbm [shape: bf16[256,256], index: 1, kind: input, shape index: {}]
  %s2 = inlined_call_operand.vmem [shape: f32[1,256], index: 2, kind: input, shape index: {}]
  %s3 = inlined_call_operand.hbm [shape: f32[16,128], index: 3, kind: input, shape index: {}]
  %s4 = inlined_call_operand.hbm [shape: bf16[128,256], index: 4, kind: input, shape index: {}]
  %s5 = inlined_call_operand.vmem [shape: f32[1,256], index: 5, kind: input, shape index: {}]
  %s6 = inlined_call_operand.hbm [shape: f32[16,256], index: 6, kind: output, shape index: {0}]
  %s7 = inlined_call_operand.hbm [shape: f32[16,256], index: 7, kind: output, shape index: {1}]
  %8 = xla_tuple %s6, %s7
  %s9 = sld [smem:[#allocation0]]
  $region58: #{_projector_forward.1} parent=0
    _
  %s11 = ssub.s32 1, %s9
  %s12 = scalar_select 0, %s11, %s9
  $region1: #{_projector_forward.1} parent=0
    #allocation2 [shape = 'u8[16384]{0}', space=vmem, size = 0x4000, scoped, tag = 'input window, operand 0, single buffered']
    #allocation3 [shape = 's32[1]{0}', space=sflag, size = 0x4, scoped, tag = 'scoped memory for _projector_forward.1']
    #allocation4 [shape = 's32[1]{0}', space=sflag, size = 0x4, scoped, tag = 'scoped memory for _projector_forward.1']
    #allocation5 [shape = 'u8[131072]{0}', space=vmem, size = 0x20000, scoped, tag = 'input window, operand 1, single buffered']
    #allocation6 [shape = 's32[1]{0}', space=sflag, size = 0x4, scoped, tag = 'scoped memory for _projector_forward.1']
    #allocation7 [shape = 'u8[8192]{0}', space=vmem, size = 0x2000, scoped, tag = 'input window, operand 3, single buffered']
    #allocation8 [shape = 'u8[65536]{0}', space=vmem, size = 0x10000, scoped, tag = 'input window, operand 4, single buffered']
    #allocation9 [shape = 's32[1]{0}', space=sflag, size = 0x4, scoped, tag = 'scoped memory for _projector_forward.1']
    #allocation10 [shape = 'u8[16384]{0}', space=vmem, size = 0x4000, scoped, tag = 'output window, operand 0, single buffered']
    #allocation11 [shape = 'u8[16384]{0}', space=vmem, size = 0x4000, scoped, tag = 'output window, operand 1, single buffered']
    #allocation12 [shape = 's32[1]{0}', space=sflag, size = 0x4, scoped, tag = 'scoped memory for _projector_forward.1']
    %13 = vsyncpa [#allocation3], 0
    %14 = vsyncpa [#allocation6], 0
    %15 = vsyncpa [#allocation9], 0
    %16 = vsyncpa [#allocation4], 0
    %17 = vsyncpa [#allocation12], 0
    // Predicated region
    $region2: #{_projector_forward.1} parent=1 // pred_check
      _
    $region3: #{_projector_forward.1} parent=1 // pred_check_branch
      %19 = sbr.rel (0) target = $region5
    $region4: #{_projector_forward.1} parent=1 // pred_region
      %21 = vsyncadd [#allocation3], 0
      %s22 = sshll.u32 %s0, 4
      %s23 = int_to_ptr.hbm [resolvable:$true] %s22
      %s24 = sshll.u32 [#allocation2], 4
      %s25 = int_to_ptr.vmem [resolvable:$true] %s24
      %30 = dma.hbm_to_vmem [thread:$0]  %s23, 512, %s25, [#allocation3], 256, 256, 16
    $region5: #{_projector_forward.1} parent=1 // pred_fallthru
      _
    // Predicated region
    $region6: #{_projector_forward.1} parent=1 // pred_check
      _
    $region7: #{_projector_forward.1} parent=1 // pred_check_branch
      %32 = sbr.rel (0) target = $region9
    $region8: #{_projector_forward.1} parent=1 // pred_region
      %34 = vsyncadd [#allocation6], 0
      %s35 = sshll.u32 %s1, 4
      %s36 = int_to_ptr.hbm [resolvable:$true] %s35
      %s37 = sshll.u32 [#allocation5], 4
      %s38 = int_to_ptr.vmem [resolvable:$true] %s37
      %43 = dma.hbm_to_vmem [thread:$0]  %s36, 4096, %s38, [#allocation6], 128, 128, 8
    $region9: #{_projector_forward.1} parent=1 // pred_fallthru
      _
    // Predicated region
    $region10: #{_projector_forward.1} parent=1 // pred_check
      _
    $region11: #{_projector_forward.1} parent=1 // pred_check_branch
      %45 = sbr.rel (0) target = $region13
    $region12: #{_projector_forward.1} parent=1 // pred_region
      _
    $region13: #{_projector_forward.1} parent=1 // pred_fallthru
      _
    // Predicated region
    $region14: #{_projector_forward.1} parent=1 // pred_check
      _
    $region15: #{_projector_forward.1} parent=1 // pred_check_branch
      %47 = sbr.rel (0) target = $region17
    $region16: #{_projector_forward.1} parent=1 // pred_region
      %49 = vsyncadd [#allocation6], 0
      %s50 = sshll.u32 %s3, 4
      %s51 = int_to_ptr.hbm [resolvable:$true] %s50
      %s52 = sshll.u32 [#allocation7], 4
      %s53 = int_to_ptr.vmem [resolvable:$true] %s52
      %58 = dma.hbm_to_vmem [thread:$0]  %s51, 256, %s53, [#allocation6], 128, 128, 8
    $region17: #{_projector_forward.1} parent=1 // pred_fallthru
      _
    // Predicated region
    $region18: #{_projector_forward.1} parent=1 // pred_check
      _
    $region19: #{_projector_forward.1} parent=1 // pred_check_branch
      %60 = sbr.rel (0) target = $region21
    $region20: #{_projector_forward.1} parent=1 // pred_region
      %62 = vsyncadd [#allocation9], 0
      %s63 = sshll.u32 %s4, 4
      %s64 = int_to_ptr.hbm [resolvable:$true] %s63
      %s65 = sshll.u32 [#allocation8], 4
      %s66 = int_to_ptr.vmem [resolvable:$true] %s65
      %71 = dma.hbm_to_vmem [thread:$0]  %s64, 2048, %s66, [#allocation9], 128, 128, 8
    $region21: #{_projector_forward.1} parent=1 // pred_fallthru
      _
    // Predicated region
    $region22: #{_projector_forward.1} parent=1 // pred_check
      _
    $region23: #{_projector_forward.1} parent=1 // pred_check_branch
      %73 = sbr.rel (0) target = $region25
    $region24: #{_projector_forward.1} parent=1 // pred_region
      _
    $region25: #{_projector_forward.1} parent=1 // pred_fallthru
      _
    // Predicated region
    $region26: #{_projector_forward.1} parent=1 // pred_check
      _
    $region27: #{_projector_forward.1} parent=1 // pred_check_branch
      %75 = sbr.rel (0) target = $region29
    $region28: #{_projector_forward.1} parent=1 // pred_region
      %77 = dma.done [#allocation3], 512
    $region29: #{_projector_forward.1} parent=1 // pred_fallthru
      _
    // Predicated region
    $region30: #{_projector_forward.1} parent=1 // pred_check
      _
    $region31: #{_projector_forward.1} parent=1 // pred_check_branch
      %79 = sbr.rel (0) target = $region33
    $region32: #{_projector_forward.1} parent=1 // pred_region
      %81 = dma.done [#allocation6], 4096
    $region33: #{_projector_forward.1} parent=1 // pred_fallthru
      _
    // Predicated region
    $region34: #{_projector_forward.1} parent=1 // pred_check
      _
    $region35: #{_projector_forward.1} parent=1 // pred_check_branch
      %83 = sbr.rel (0) target = $region37
    $region36: #{_projector_forward.1} parent=1 // pred_region
      %85 = dma.done [#allocation6], 256
    $region37: #{_projector_forward.1} parent=1 // pred_fallthru
      _
    // Predicated region
    $region38: #{_projector_forward.1} parent=1 // pred_check
      _
    $region39: #{_projector_forward.1} parent=1 // pred_check_branch
      %87 = sbr.rel (0) target = $region41
    $region40: #{_projector_forward.1} parent=1 // pred_region
      %89 = dma.done [#allocation9], 2048
    $region41: #{_projector_forward.1} parent=1 // pred_fallthru
      _
    %v90 = vld [vmem:[#allocation2] sm:$0xff]
    %v91 = vld [vmem:[#allocation2 + $0x8] sm:$0xff]
    %v92 = vld [vmem:[#allocation2 + $0x10] sm:$0xff]
    %v93 = vld [vmem:[#allocation2 + $0x18] sm:$0xff]
    %v94 = vpack.c.bf16 %v92, %v90
    %v95 = vpack.c.bf16 %v93, %v91
    %v96 = vld [vmem:[#allocation5] sm:$0xff]
    %v97 = vld [vmem:[#allocation5 + $0x8] sm:$0xff]
    %v98 = vld [vmem:[#allocation5 + $0x10] sm:$0xff]
    %v99 = vld [vmem:[#allocation5 + $0x18] sm:$0xff]
    %v100 = vld [vmem:[#allocation5 + $0x20] sm:$0xff]
    %v101 = vld [vmem:[#allocation5 + $0x28] sm:$0xff]
    %v102 = vld [vmem:[#allocation5 + $0x30] sm:$0xff]
    %v103 = vld [vmem:[#allocation5 + $0x38] sm:$0xff]
    %v104 = vld [vmem:[#allocation5 + $0x40] sm:$0xff]
    %v105 = vld [vmem:[#allocation5 + $0x48] sm:$0xff]
    %v106 = vld [vmem:[#allocation5 + $0x50] sm:$0xff]
    %v107 = vld [vmem:[#allocation5 + $0x58] sm:$0xff]
    %v108 = vld [vmem:[#allocation5 + $0x60] sm:$0xff]
    %v109 = vld [vmem:[#allocation5 + $0x68] sm:$0xff]
    %v110 = vld [vmem:[#allocation5 + $0x70] sm:$0xff]
    %v111 = vld [vmem:[#allocation5 + $0x78] sm:$0xff]
    %v112 = vld [vmem:[#allocation5 + $0x80] sm:$0xff]
    %v113 = vld [vmem:[#allocation5 + $0x88] sm:$0xff]
    %v114 = vld [vmem:[#allocation5 + $0x90] sm:$0xff]
    %v115 = vld [vmem:[#allocation5 + $0x98] sm:$0xff]
    %v116 = vld [vmem:[#allocation5 + $0xa0] sm:$0xff]
    %v117 = vld [vmem:[#allocation5 + $0xa8] sm:$0xff]
    %v118 = vld [vmem:[#allocation5 + $0xb0] sm:$0xff]
    %v119 = vld [vmem:[#allocation5 + $0xb8] sm:$0xff]
    %v120 = vld [vmem:[#allocation5 + $0xc0] sm:$0xff]
    %v121 = vld [vmem:[#allocation5 + $0xc8] sm:$0xff]
    %v122 = vld [vmem:[#allocation5 + $0xd0] sm:$0xff]
    %v123 = vld [vmem:[#allocation5 + $0xd8] sm:$0xff]
    %v124 = vld [vmem:[#allocation5 + $0xe0] sm:$0xff]
    %v125 = vld [vmem:[#allocation5 + $0xe8] sm:$0xff]
    %v126 = vld [vmem:[#allocation5 + $0xf0] sm:$0xff]
    %v127 = vld [vmem:[#allocation5 + $0xf8] sm:$0xff]
    %v128 = vld [vmem:[%s2] sm:$0x3]
    %v130 = vperm.slane %v128, 0
    %v131 = vperm.slane %v128, 1
    %v166 = vunpack.c.l.b16 %v96
    %v167 = vunpack.c.h.b16 %v96
    %v168 = vunpack.c.l.b16 %v97
    %v169 = vunpack.c.h.b16 %v97
    %v170 = vunpack.c.l.b16 %v98
    %v171 = vunpack.c.h.b16 %v98
    %v172 = vunpack.c.l.b16 %v99
    %v173 = vunpack.c.h.b16 %v99
    %v174 = vunpack.c.l.b16 %v100
    %v175 = vunpack.c.h.b16 %v100
    %v176 = vunpack.c.l.b16 %v101
    %v177 = vunpack.c.h.b16 %v101
    %v178 = vunpack.c.l.b16 %v102
    %v179 = vunpack.c.h.b16 %v102
    %v180 = vunpack.c.l.b16 %v103
    %v181 = vunpack.c.h.b16 %v103
    %v182 = vunpack.c.l.b16 %v104
    %v183 = vunpack.c.h.b16 %v104
    %v184 = vunpack.c.l.b16 %v105
    %v185 = vunpack.c.h.b16 %v105
    %v186 = vunpack.c.l.b16 %v106
    %v187 = vunpack.c.h.b16 %v106
    %v188 = vunpack.c.l.b16 %v107
    %v189 = vunpack.c.h.b16 %v107
    %v190 = vunpack.c.l.b16 %v108
    %v191 = vunpack.c.h.b16 %v108
    %v192 = vunpack.c.l.b16 %v109
    %v193 = vunpack.c.h.b16 %v109
    %v194 = vunpack.c.l.b16 %v110
    %v195 = vunpack.c.h.b16 %v110
    %v196 = vunpack.c.l.b16 %v111
    %v197 = vunpack.c.h.b16 %v111
    %v198 = vunpack.c.l.b16 %v112
    %v199 = vunpack.c.h.b16 %v112
    %v200 = vunpack.c.l.b16 %v113
    %v201 = vunpack.c.h.b16 %v113
    %v202 = vunpack.c.l.b16 %v114
    %v203 = vunpack.c.h.b16 %v114
    %v204 = vunpack.c.l.b16 %v115
    %v205 = vunpack.c.h.b16 %v115
    %v206 = vunpack.c.l.b16 %v116
    %v207 = vunpack.c.h.b16 %v116
    %v208 = vunpack.c.l.b16 %v117
    %v209 = vunpack.c.h.b16 %v117
    %v210 = vunpack.c.l.b16 %v118
    %v211 = vunpack.c.h.b16 %v118
    %v212 = vunpack.c.l.b16 %v119
    %v213 = vunpack.c.h.b16 %v119
    %v214 = vunpack.c.l.b16 %v120
    %v215 = vunpack.c.h.b16 %v120
    %v216 = vunpack.c.l.b16 %v121
    %v217 = vunpack.c.h.b16 %v121
    %v218 = vunpack.c.l.b16 %v122
    %v219 = vunpack.c.h.b16 %v122
    %v220 = vunpack.c.l.b16 %v123
    %v221 = vunpack.c.h.b16 %v123
    %v222 = vunpack.c.l.b16 %v124
    %v223 = vunpack.c.h.b16 %v124
    %v224 = vunpack.c.l.b16 %v125
    %v225 = vunpack.c.h.b16 %v125
    %v226 = vunpack.c.l.b16 %v126
    %v227 = vunpack.c.h.b16 %v126
    %v228 = vunpack.c.l.b16 %v127
    %v229 = vunpack.c.h.b16 %v127
    %v230 = vpack.c.b16 %v168, %v166
    %v231 = vpack.c.b16 %v169, %v167
    %v232 = vpack.c.b16 %v172, %v170
    %v233 = vpack.c.b16 %v173, %v171
    %v234 = vpack.c.b16 %v176, %v174
    %v235 = vpack.c.b16 %v177, %v175
    %v236 = vpack.c.b16 %v180, %v178
    %v237 = vpack.c.b16 %v181, %v179
    %v238 = vpack.c.b16 %v184, %v182
    %v239 = vpack.c.b16 %v185, %v183
    %v240 = vpack.c.b16 %v188, %v186
    %v241 = vpack.c.b16 %v189, %v187
    %v242 = vpack.c.b16 %v192, %v190
    %v243 = vpack.c.b16 %v193, %v191
    %v244 = vpack.c.b16 %v196, %v194
    %v245 = vpack.c.b16 %v197, %v195
    %v246 = vpack.c.b16 %v200, %v198
    %v247 = vpack.c.b16 %v201, %v199
    %v248 = vpack.c.b16 %v204, %v202
    %v249 = vpack.c.b16 %v205, %v203
    %v250 = vpack.c.b16 %v208, %v206
    %v251 = vpack.c.b16 %v209, %v207
    %v252 = vpack.c.b16 %v212, %v210
    %v253 = vpack.c.b16 %v213, %v211
    %v254 = vpack.c.b16 %v216, %v214
    %v255 = vpack.c.b16 %v217, %v215
    %v256 = vpack.c.b16 %v220, %v218
    %v257 = vpack.c.b16 %v221, %v219
    %v258 = vpack.c.b16 %v224, %v222
    %v259 = vpack.c.b16 %v225, %v223
    %v260 = vpack.c.b16 %v228, %v226
    %v261 = vpack.c.b16 %v229, %v227
    %294 = vmatpush.bf16.msra.mxu0 %v244
    %295 = vmatpush.bf16.msra.mxu0 %v242
    %296 = vmatpush.bf16.msra.mxu0 %v240
    %297 = vmatpush.bf16.msra.mxu0 %v238
    %298 = vmatpush.bf16.msra.mxu0 %v236
    %299 = vmatpush.bf16.msra.mxu0 %v234
    %300 = vmatpush.bf16.msra.mxu0 %v232
    %301 = vmatpush.bf16.msra.mxu0 %v230
    %302 = vmatmul.bf16.gmra.mxu0 %v94
    %v303 = vpop.f32.mrf.mxu0
    %v304 = vadd.f32 %v130, %v303
    %v305 = vpop.f32.mrf.mxu0
    %v306 = vadd.f32 %v130, %v305
    %307 = vdwg.mxu0
    %308 = vmatpush.bf16.msra.mxu0 %v260
    %309 = vmatpush.bf16.msra.mxu0 %v258
    %310 = vmatpush.bf16.msra.mxu0 %v256
    %311 = vmatpush.bf16.msra.mxu0 %v254
    %312 = vmatpush.bf16.msra.mxu0 %v252
    %313 = vmatpush.bf16.msra.mxu0 %v250
    %314 = vmatpush.bf16.msra.mxu0 %v248
    %315 = vmatpush.bf16.msra.mxu0 %v246
    %316 = vmatmul.bf16.gmra.mxu0 %v95
    %v317 = vpop.f32.mrf.mxu0
    %v318 = vadd.f32 %v304, %v317
    %v319 = vpop.f32.mrf.mxu0
    %v320 = vadd.f32 %v306, %v319
    %321 = vdwg.mxu0
    %322 = vmatpush.bf16.msra.mxu0 %v245
    %323 = vmatpush.bf16.msra.mxu0 %v243
    %324 = vmatpush.bf16.msra.mxu0 %v241
    %325 = vmatpush.bf16.msra.mxu0 %v239
    %326 = vmatpush.bf16.msra.mxu0 %v237
    %327 = vmatpush.bf16.msra.mxu0 %v235
    %328 = vmatpush.bf16.msra.mxu0 %v233
    %329 = vmatpush.bf16.msra.mxu0 %v231
    %330 = vmatmul.bf16.gmra.mxu0 %v94
    %v331 = vpop.f32.mrf.mxu0
    %v332 = vadd.f32 %v131, %v331
    %v333 = vpop.f32.mrf.mxu0
    %v334 = vadd.f32 %v131, %v333
    %335 = vdwg.mxu0
    %336 = vmatpush.bf16.msra.mxu0 %v261
    %337 = vmatpush.bf16.msra.mxu0 %v259
    %338 = vmatpush.bf16.msra.mxu0 %v257
    %339 = vmatpush.bf16.msra.mxu0 %v255
    %340 = vmatpush.bf16.msra.mxu0 %v253
    %341 = vmatpush.bf16.msra.mxu0 %v251
    %342 = vmatpush.bf16.msra.mxu0 %v249
    %343 = vmatpush.bf16.msra.mxu0 %v247
    %344 = vmatmul.bf16.gmra.mxu0 %v95
    %v345 = vpop.f32.mrf.mxu0
    %v346 = vadd.f32 %v332, %v345
    %v347 = vpop.f32.mrf.mxu0
    %v348 = vadd.f32 %v334, %v347
    %349 = vdwg.mxu0
    %350 = vst [vmem:[#allocation10] sm:$0xff] %v318
    %351 = vst [vmem:[#allocation10 + $0x8] sm:$0xff] %v346
    %352 = vst [vmem:[#allocation10 + $0x10] sm:$0xff] %v320
    %353 = vst [vmem:[#allocation10 + $0x18] sm:$0xff] %v348
    %v354 = vld [vmem:[#allocation7] sm:$0xff]
    %v355 = vld [vmem:[#allocation7 + $0x8] sm:$0xff]
    %v356 = vpack.c.bf16 %v355, %v354
    %v357 = vld [vmem:[#allocation8] sm:$0xff]
    %v358 = vld [vmem:[#allocation8 + $0x8] sm:$0xff]
    %v359 = vld [vmem:[#allocation8 + $0x10] sm:$0xff]
    %v360 = vld [vmem:[#allocation8 + $0x18] sm:$0xff]
    %v361 = vld [vmem:[#allocation8 + $0x20] sm:$0xff]
    %v362 = vld [vmem:[#allocation8 + $0x28] sm:$0xff]
    %v363 = vld [vmem:[#allocation8 + $0x30] sm:$0xff]
    %v364 = vld [vmem:[#allocation8 + $0x38] sm:$0xff]
    %v365 = vld [vmem:[#allocation8 + $0x40] sm:$0xff]
    %v366 = vld [vmem:[#allocation8 + $0x48] sm:$0xff]
    %v367 = vld [vmem:[#allocation8 + $0x50] sm:$0xff]
    %v368 = vld [vmem:[#allocation8 + $0x58] sm:$0xff]
    %v369 = vld [vmem:[#allocation8 + $0x60] sm:$0xff]
    %v370 = vld [vmem:[#allocation8 + $0x68] sm:$0xff]
    %v371 = vld [vmem:[#allocation8 + $0x70] sm:$0xff]
    %v372 = vld [vmem:[#allocation8 + $0x78] sm:$0xff]
    %v373 = vld [vmem:[%s5] sm:$0x3]
    %v375 = vperm.slane %v373, 0
    %v376 = vperm.slane %v373, 1
    %v395 = vunpack.c.l.b16 %v357
    %v396 = vunpack.c.h.b16 %v357
    %v397 = vunpack.c.l.b16 %v358
    %v398 = vunpack.c.h.b16 %v358
    %v399 = vunpack.c.l.b16 %v359
    %v400 = vunpack.c.h.b16 %v359
    %v401 = vunpack.c.l.b16 %v360
    %v402 = vunpack.c.h.b16 %v360
    %v403 = vunpack.c.l.b16 %v361
    %v404 = vunpack.c.h.b16 %v361
    %v405 = vunpack.c.l.b16 %v362
    %v406 = vunpack.c.h.b16 %v362
    %v407 = vunpack.c.l.b16 %v363
    %v408 = vunpack.c.h.b16 %v363
    %v409 = vunpack.c.l.b16 %v364
    %v410 = vunpack.c.h.b16 %v364
    %v411 = vunpack.c.l.b16 %v365
    %v412 = vunpack.c.h.b16 %v365
    %v413 = vunpack.c.l.b16 %v366
    %v414 = vunpack.c.h.b16 %v366
    %v415 = vunpack.c.l.b16 %v367
    %v416 = vunpack.c.h.b16 %v367
    %v417 = vunpack.c.l.b16 %v368
    %v418 = vunpack.c.h.b16 %v368
    %v419 = vunpack.c.l.b16 %v369
    %v420 = vunpack.c.h.b16 %v369
    %v421 = vunpack.c.l.b16 %v370
    %v422 = vunpack.c.h.b16 %v370
    %v423 = vunpack.c.l.b16 %v371
    %v424 = vunpack.c.h.b16 %v371
    %v425 = vunpack.c.l.b16 %v372
    %v426 = vunpack.c.h.b16 %v372
    %v427 = vpack.c.b16 %v397, %v395
    %v428 = vpack.c.b16 %v398, %v396
    %v429 = vpack.c.b16 %v401, %v399
    %v430 = vpack.c.b16 %v402, %v400
    %v431 = vpack.c.b16 %v405, %v403
    %v432 = vpack.c.b16 %v406, %v404
    %v433 = vpack.c.b16 %v409, %v407
    %v434 = vpack.c.b16 %v410, %v408
    %v435 = vpack.c.b16 %v413, %v411
    %v436 = vpack.c.b16 %v414, %v412
    %v437 = vpack.c.b16 %v417, %v415
    %v438 = vpack.c.b16 %v418, %v416
    %v439 = vpack.c.b16 %v421, %v419
    %v440 = vpack.c.b16 %v422, %v420
    %v441 = vpack.c.b16 %v425, %v423
    %v442 = vpack.c.b16 %v426, %v424
    %459 = vmatpush.bf16.msra.mxu0 %v441
    %460 = vmatpush.bf16.msra.mxu0 %v439
    %461 = vmatpush.bf16.msra.mxu0 %v437
    %462 = vmatpush.bf16.msra.mxu0 %v435
    %463 = vmatpush.bf16.msra.mxu0 %v433
    %464 = vmatpush.bf16.msra.mxu0 %v431
    %465 = vmatpush.bf16.msra.mxu0 %v429
    %466 = vmatpush.bf16.msra.mxu0 %v427
    %467 = vmatmul.bf16.gmra.mxu0 %v356
    %v468 = vpop.f32.mrf.mxu0
    %v469 = vadd.f32 %v375, %v468
    %v470 = vpop.f32.mrf.mxu0
    %v471 = vadd.f32 %v375, %v470
    %472 = vdwg.mxu0
    %473 = vmatpush.bf16.msra.mxu0 %v442
    %474 = vmatpush.bf16.msra.mxu0 %v440
    %475 = vmatpush.bf16.msra.mxu0 %v438
    %476 = vmatpush.bf16.msra.mxu0 %v436
    %477 = vmatpush.bf16.msra.mxu0 %v434
    %478 = vmatpush.bf16.msra.mxu0 %v432
    %479 = vmatpush.bf16.msra.mxu0 %v430
    %480 = vmatpush.bf16.msra.mxu0 %v428
    %481 = vmatmul.bf16.gmra.mxu0 %v356
    %v482 = vpop.f32.mrf.mxu0
    %v483 = vadd.f32 %v376, %v482
    %v484 = vpop.f32.mrf.mxu0
    %v485 = vadd.f32 %v376, %v484
    %486 = vdwg.mxu0
    %487 = vst [vmem:[#allocation11] sm:$0xff] %v469
    %488 = vst [vmem:[#allocation11 + $0x8] sm:$0xff] %v483
    %489 = vst [vmem:[#allocation11 + $0x10] sm:$0xff] %v471
    %490 = vst [vmem:[#allocation11 + $0x18] sm:$0xff] %v485
    // Predicated region
    $region42: #{_projector_forward.1} parent=1 // pred_check
      _
    $region43: #{_projector_forward.1} parent=1 // pred_check_branch
      %492 = sbr.rel (0) target = $region45
    $region44: #{_projector_forward.1} parent=1 // pred_region
      %494 = vsyncadd [#allocation4], 0
      %s495 = sshll.u32 [#allocation10], 4
      %s496 = int_to_ptr.vmem [resolvable:$true] %s495
      %s497 = sshll.u32 %s6, 4
      %s498 = int_to_ptr.hbm [resolvable:$true] %s497
      %503 = dma.vmem_to_hbm [thread:$0]  %s496, 512, %s498, [#allocation4], 256, 256, 16
    $region45: #{_projector_forward.1} parent=1 // pred_fallthru
      _
    // Predicated region
    $region46: #{_projector_forward.1} parent=1 // pred_check
      _
    $region47: #{_projector_forward.1} parent=1 // pred_check_branch
      %505 = sbr.rel (0) target = $region49
    $region48: #{_projector_forward.1} parent=1 // pred_region
      %507 = vsyncadd [#allocation12], 0
      %s508 = sshll.u32 [#allocation11], 4
      %s509 = int_to_ptr.vmem [resolvable:$true] %s508
      %s510 = sshll.u32 %s7, 4
      %s511 = int_to_ptr.hbm [resolvable:$true] %s510
      %516 = dma.vmem_to_hbm [thread:$0]  %s509, 512, %s511, [#allocation12], 256, 256, 16
    $region49: #{_projector_forward.1} parent=1 // pred_fallthru
      _
    // Predicated region
    $region50: #{_projector_forward.1} parent=1 // pred_check
      _
    $region51: #{_projector_forward.1} parent=1 // pred_check_branch
      %518 = sbr.rel (0) target = $region53
    $region52: #{_projector_forward.1} parent=1 // pred_region
      %520 = dma.done [#allocation4], 512
    $region53: #{_projector_forward.1} parent=1 // pred_fallthru
      _
    // Predicated region
    $region54: #{_projector_forward.1} parent=1 // pred_check
      _
    $region55: #{_projector_forward.1} parent=1 // pred_check_branch
      %522 = sbr.rel (0) target = $region57
    $region56: #{_projector_forward.1} parent=1 // pred_region
      %524 = dma.done [#allocation12], 512
    $region57: #{_projector_forward.1} parent=1 // pred_fallthru
      _
    %525 = vsyncpa [#allocation3], 1
    %526 = vsyncpa [#allocation6], 1
    %527 = vsyncpa [#allocation9], 1
    %528 = vsyncpa [#allocation4], 1
    %529 = vsyncpa [#allocation12], 1

</llo_original>
